<compile_context>
chip_gen: v5e
topology: v5e:2x2
jax: 0.10.0
libtpu: 0.0.40
codegen_flags: <defaults>
</compile_context>

<pallas_src>
import numpy as np

import jax
import jax.numpy as jnp
from jax.experimental import pallas as pl
from jax.experimental.pallas import tpu as pltpu


def _make_convrnn_kernel(tap_offsets, n_ext):
    """Builds the fused ConvRNN kernel body.

    Block shapes seen by the kernel:
      w_ref: (KK, tc, C)     compute dtype, per-tap fused [conv_x | conv_h] weights
      b_ref: (tc, 1)         f32, pre-summed bias (bx + bh)
      z_ref: (1, C, L)       compute dtype, flattened padded activation slab
      o_ref: (1, tc, n_ext)  f32, lane-dense output (extended width Wp)
    """

    def kernel(w_ref, b_ref, z_ref, o_ref):
        acc = None
        # K*K taps, each a constant lane offset into the flat pixel axis.
        # Static Python loop -> unrolled; f32 accumulation in vregs.
        for t, off in enumerate(tap_offsets):
            contrib = jnp.dot(
                w_ref[t],                         # (tc, C)
                z_ref[0, :, off:off + n_ext],     # (C, n_ext)
                preferred_element_type=jnp.float32,
            )
            acc = contrib if acc is None else acc + contrib
        # Bias added in f32 after the matmul (exact, free VPU op).
        o_ref[0] = (acc + b_ref[...]).astype(o_ref.dtype)

    return kernel


def conv_rnn_forward(x_nchw, params, hx_nchw=None, *, padding=1, dilation=1,
                     compute_dtype=jnp.bfloat16):
    """ConvRNN forward. x_nchw: (B, Cin, H, W) -> (B, Cout, H', W') float32.

    compute_dtype controls the MXU operand dtype (bf16 default: native on
    v5e/v6e/v7x MXUs, halves operand HBM/DMA traffic).  Accumulation, bias
    add and output stay float32.
    """
    wx, bx, wh, bh = params['wx'], params['bx'], params['wh'], params['bh']
    K = wx.shape[0]
    Cin = wx.shape[2]
    Cout = wx.shape[3]
    B, _, H, W = x_nchw.shape

    if hx_nchw is None:
        hx_nchw = jnp.zeros((B, Cout, H, W), x_nchw.dtype)

    Hp, Wp = H + 2 * padding, W + 2 * padding
    H_out = Hp - dilation * (K - 1)
    W_out = Wp - dilation * (K - 1)
    C = Cin + Cout
    KK = K * K

    # Output is computed over the "extended" width Wp (keeps every tap a pure
    # flat offset); the W_out..Wp columns are garbage and sliced off at the end.
    n_ext = H_out * Wp
    halo = dilation * (K - 1) * (Wp + 1)            # largest tap offset
    L = max(128, -(-(halo + n_ext) // 128) * 128)    # flat length, 128-aligned

    cdt = np.dtype(compute_dtype)

    # ---- wrapper glue (all cheap: one concat + pad + reshape, NO transposes,
    # NO K*K patch blow-up; cast to the compute dtype BEFORE anything grows).
    z = jnp.concatenate([x_nchw, hx_nchw], axis=1).astype(cdt)          # (B,C,H,W)
    zp = jnp.pad(z, ((0, 0), (0, 0), (padding,) * 2, (padding,) * 2))   # (B,C,Hp,Wp)
    zflat = jnp.pad(zp.reshape(B, C, Hp * Wp),
                    ((0, 0), (0, 0), (0, L - Hp * Wp)))                 # (B,C,L)

    # Fused per-tap weights: (KK, Cout, C), channel order matches z's concat.
    w = jnp.concatenate([wx, wh], axis=2)                               # (K,K,C,Cout)
    w = jnp.transpose(w, (0, 1, 3, 2)).reshape(KK, Cout, C).astype(cdt)
    b = (bx + bh).astype(jnp.float32).reshape(Cout, 1)                  # f32 bias

    tap_offsets = tuple(kh * dilation * Wp + kw * dilation
                        for kh in range(K) for kw in range(K))

    # Cout tiling keeps weight/output blocks bounded for large channel counts.
    tc = 128 if (Cout >= 256 and Cout % 128 == 0) else Cout
    n_ct = Cout // tc
    grid = (B, n_ct)

    # VMEM budget (double-buffered blocks + in-kernel temporaries).
    cb = cdt.itemsize
    z_blk = C * L * cb
    w_blk = KK * tc * C * cb
    b_blk = tc * 4
    o_blk = tc * n_ext * 4
    temps = 2 * C * n_ext * cb + 2 * tc * n_ext * 4
    vmem_needed = int(1.5 * (2 * (z_blk + w_blk + b_blk + o_blk) + temps))
    cp_kwargs = dict(dimension_semantics=("parallel", "parallel"))
    if vmem_needed > 30 * 1024 * 1024:
        cp_kwargs["vmem_limit_bytes"] = min(vmem_needed, 64 * 1024 * 1024)

    flops = 2 * B * Cout * KK * C * n_ext
    bytes_accessed = (n_ct * B * C * L * cb            # activation slab reads
                      + B * KK * Cout * C * cb         # weights
                      + Cout * 4                       # bias
                      + B * Cout * n_ext * 4)          # f32 output writes

    out_ext = pl.pallas_call(
        _make_convrnn_kernel(tap_offsets, n_ext),
        out_shape=jax.ShapeDtypeStruct((B, Cout, n_ext), jnp.float32),
        grid_spec=pltpu.PrefetchScalarGridSpec(
            num_scalar_prefetch=0,
            grid=grid,
            in_specs=[
                pl.BlockSpec((KK, tc, C), lambda bi, j: (0, j, 0)),   # weights
                pl.BlockSpec((tc, 1), lambda bi, j: (j, 0)),          # bias (f32)
                pl.BlockSpec((1, C, L), lambda bi, j: (bi, 0, 0)),    # activations
            ],
            out_specs=pl.BlockSpec((1, tc, n_ext), lambda bi, j: (bi, j, 0)),
        ),
        compiler_params=pltpu.CompilerParams(**cp_kwargs),
        cost_estimate=pl.CostEstimate(flops=flops, transcendentals=0,
                                      bytes_accessed=bytes_accessed),
    )(w, b, zflat)

    # (B, Cout, H_out*Wp) -> NCHW directly; drop the extended-width garbage.
    return out_ext.reshape(B, Cout, H_out, Wp)[:, :, :, :W_out]


def init_params(key, input_channel, output_channel, kernel_size):
    """Deterministic PyTorch-Conv2d-style init (uniform in +/- 1/sqrt(fan_in))."""
    k1, k2, k3, k4 = jax.random.split(key, 4)
    fan_x = input_channel * kernel_size * kernel_size
    fan_h = output_channel * kernel_size * kernel_size
    bnd_x = 1.0 / jnp.sqrt(fan_x)
    bnd_h = 1.0 / jnp.sqrt(fan_h)
    # HWIO weights.
    wx = jax.random.uniform(k1, (kernel_size, kernel_size, input_channel, output_channel),
                            jnp.float32, -bnd_x, bnd_x)
    bx = jax.random.uniform(k2, (output_channel,), jnp.float32, -bnd_x, bnd_x)
    wh = jax.random.uniform(k3, (kernel_size, kernel_size, output_channel, output_channel),
                            jnp.float32, -bnd_h, bnd_h)
    bh = jax.random.uniform(k4, (output_channel,), jnp.float32, -bnd_h, bnd_h)
    return {'wx': wx, 'bx': bx, 'wh': wh, 'bh': bh}


def _reference(x_nchw, params, hx_nchw, padding, dilation):
    """Pure-JAX reference using lax.conv_general_dilated (for verification)."""
    def conv(inp, w, b):
        out = jax.lax.conv_general_dilated(
            inp, w, window_strides=(1, 1),
            padding=[(padding, padding), (padding, padding)],
            rhs_dilation=(dilation, dilation),
            dimension_numbers=('NCHW', 'HWIO', 'NCHW'))
        return out + b.reshape(1, -1, 1, 1)
    return conv(x_nchw, params['wx'], params['bx']) + conv(hx_nchw, params['wh'], params['bh'])


if __name__ == "__main__":
    B, Cin, H, W = 2, 4, 16, 16
    Cout, K = 8, 3

    key = jax.random.PRNGKey(0)
    kx, kh, kp = jax.random.split(key, 3)
    x = jax.random.normal(kx, (B, Cin, H, W), jnp.float32)
    hx = jax.random.normal(kh, (B, Cout, H, W), jnp.float32)
    params = init_params(kp, Cin, Cout, K)

    # bf16 default path: explicit hidden state, hx=None (zeros), dilated conv.
    out = jax.block_until_ready(conv_rnn_forward(x, params, hx, padding=1, dilation=1))
    out0 = jax.block_until_ready(conv_rnn_forward(x, params, None, padding=1, dilation=1))
    out2 = jax.block_until_ready(conv_rnn_forward(x, params, hx, padding=2, dilation=2))
    # f32 compute path for strict parity with the f32 reference.
    out_f32 = jax.block_until_ready(
        conv_rnn_forward(x, params, hx, padding=1, dilation=1, compute_dtype=jnp.float32))

    assert out.shape == (B, Cout, H, W)
    assert out0.shape == (B, Cout, H, W)
    assert out2.shape == (B, Cout, H, W)

    # bf16-consistent reference: round operands (not biases) to bf16 like the
    # kernel does, then run the f32 conv reference -> products are exact, only
    # accumulation-order noise remains, so a tight tolerance still applies.
    def bf16ify(a):
        return a.astype(jnp.bfloat16).astype(jnp.float32)

    params_bf = {'wx': bf16ify(params['wx']), 'wh': bf16ify(params['wh']),
                 'bx': params['bx'], 'bh': params['bh']}
    x_bf, hx_bf = bf16ify(x), bf16ify(hx)
    zeros_h = jnp.zeros((B, Cout, H, W), jnp.float32)

    ref = _reference(x_bf, params_bf, hx_bf, 1, 1)
    ref0 = _reference(x_bf, params_bf, zeros_h, 1, 1)
    ref2 = _reference(x_bf, params_bf, hx_bf, 2, 2)
    ref_f32 = _reference(x, params, hx, 1, 1)

    assert jnp.allclose(out, ref, atol=2e-3, rtol=2e-3)
    assert jnp.allclose(out0, ref0, atol=2e-3, rtol=2e-3)
    assert jnp.allclose(out2, ref2, atol=2e-3, rtol=2e-3)
    assert jnp.allclose(out_f32, ref_f32, atol=2e-3, rtol=2e-3)

    print("KERNEL_OK")
</pallas_src>

<mosaic_0001>
module attributes {stable_mosaic.version = 11 : i64} {
  func.func @kernel(%arg0: i32, %arg1: i32, %arg2: memref<9x8x12xbf16, #tpu.memory_space<vmem>>, %arg3: memref<8x1xf32, #tpu.memory_space<vmem>>, %arg4: memref<1x12x384xbf16, #tpu.memory_space<vmem>>, %arg5: memref<1x8x288xf32, #tpu.memory_space<vmem>>) attributes {dimension_semantics = [#tpu.dimension_semantics<parallel>, #tpu.dimension_semantics<parallel>], iteration_bounds = array<i64: 2, 1>, scalar_prefetch = 0 : i64, scratch_operands = 0 : i64, tpu.core_type = #tpu.core_type<tc>, window_params = [{transform_indices = @transform_0, window_bounds = array<i64: 9, 8, 12>}, {transform_indices = @transform_1, window_bounds = array<i64: 8, 1>}, {transform_indices = @transform_2, window_bounds = array<i64: 1, 12, 384>}, {transform_indices = @transform_3, window_bounds = array<i64: 1, 8, 288>}]} {
    %c0 = arith.constant 0 : index
    %c0_0 = arith.constant 0 : index
    %c0_1 = arith.constant 0 : index
    %0 = vector.load %arg2[%c0, %c0_0, %c0_1] : memref<9x8x12xbf16, #tpu.memory_space<vmem>>, vector<1x8x12xbf16>
    %1 = vector.shape_cast %0 : vector<1x8x12xbf16> to vector<8x12xbf16>
    %c0_2 = arith.constant 0 : index
    %c0_3 = arith.constant 0 : index
    %c0_4 = arith.constant 0 : index
    %2 = vector.load %arg4[%c0_2, %c0_3, %c0_4] : memref<1x12x384xbf16, #tpu.memory_space<vmem>>, vector<1x12x288xbf16>
    %3 = vector.shape_cast %2 : vector<1x12x288xbf16> to vector<12x288xbf16>
    %cst = arith.constant dense<0.000000e+00> : vector<8x288xf32>
    %4 = tpu.matmul %1, %3, %cst {dimension_numbers = #tpu.dot_dimension_numbers<[1], [0], [0], [1], [0, 0, 1, 1], [], []>} : vector<8x12xbf16>, vector<12x288xbf16>, vector<8x288xf32> -> vector<8x288xf32>
    %c1 = arith.constant 1 : index
    %c0_5 = arith.constant 0 : index
    %c0_6 = arith.constant 0 : index
    %5 = vector.load %arg2[%c1, %c0_5, %c0_6] : memref<9x8x12xbf16, #tpu.memory_space<vmem>>, vector<1x8x12xbf16>
    %6 = vector.shape_cast %5 : vector<1x8x12xbf16> to vector<8x12xbf16>
    %c0_7 = arith.constant 0 : index
    %c0_8 = arith.constant 0 : index
    %c1_9 = arith.constant 1 : index
    %7 = vector.load %arg4[%c0_7, %c0_8, %c1_9] : memref<1x12x384xbf16, #tpu.memory_space<vmem>>, vector<1x12x288xbf16>
    %8 = vector.shape_cast %7 : vector<1x12x288xbf16> to vector<12x288xbf16>
    %cst_10 = arith.constant dense<0.000000e+00> : vector<8x288xf32>
    %9 = tpu.matmul %6, %8, %cst_10 {dimension_numbers = #tpu.dot_dimension_numbers<[1], [0], [0], [1], [0, 0, 1, 1], [], []>} : vector<8x12xbf16>, vector<12x288xbf16>, vector<8x288xf32> -> vector<8x288xf32>
    %10 = arith.addf %4, %9 : vector<8x288xf32>
    %c2 = arith.constant 2 : index
    %c0_11 = arith.constant 0 : index
    %c0_12 = arith.constant 0 : index
    %11 = vector.load %arg2[%c2, %c0_11, %c0_12] : memref<9x8x12xbf16, #tpu.memory_space<vmem>>, vector<1x8x12xbf16>
    %12 = vector.shape_cast %11 : vector<1x8x12xbf16> to vector<8x12xbf16>
    %c0_13 = arith.constant 0 : index
    %c0_14 = arith.constant 0 : index
    %c2_15 = arith.constant 2 : index
    %13 = vector.load %arg4[%c0_13, %c0_14, %c2_15] : memref<1x12x384xbf16, #tpu.memory_space<vmem>>, vector<1x12x288xbf16>
    %14 = vector.shape_cast %13 : vector<1x12x288xbf16> to vector<12x288xbf16>
    %cst_16 = arith.constant dense<0.000000e+00> : vector<8x288xf32>
    %15 = tpu.matmul %12, %14, %cst_16 {dimension_numbers = #tpu.dot_dimension_numbers<[1], [0], [0], [1], [0, 0, 1, 1], [], []>} : vector<8x12xbf16>, vector<12x288xbf16>, vector<8x288xf32> -> vector<8x288xf32>
    %16 = arith.addf %10, %15 : vector<8x288xf32>
    %c3 = arith.constant 3 : index
    %c0_17 = arith.constant 0 : index
    %c0_18 = arith.constant 0 : index
    %17 = vector.load %arg2[%c3, %c0_17, %c0_18] : memref<9x8x12xbf16, #tpu.memory_space<vmem>>, vector<1x8x12xbf16>
    %18 = vector.shape_cast %17 : vector<1x8x12xbf16> to vector<8x12xbf16>
    %c0_19 = arith.constant 0 : index
    %c0_20 = arith.constant 0 : index
    %c18 = arith.constant 18 : index
    %19 = vector.load %arg4[%c0_19, %c0_20, %c18] : memref<1x12x384xbf16, #tpu.memory_space<vmem>>, vector<1x12x288xbf16>
    %20 = vector.shape_cast %19 : vector<1x12x288xbf16> to vector<12x288xbf16>
    %cst_21 = arith.constant dense<0.000000e+00> : vector<8x288xf32>
    %21 = tpu.matmul %18, %20, %cst_21 {dimension_numbers = #tpu.dot_dimension_numbers<[1], [0], [0], [1], [0, 0, 1, 1], [], []>} : vector<8x12xbf16>, vector<12x288xbf16>, vector<8x288xf32> -> vector<8x288xf32>
    %22 = arith.addf %16, %21 : vector<8x288xf32>
    %c4 = arith.constant 4 : index
    %c0_22 = arith.constant 0 : index
    %c0_23 = arith.constant 0 : index
    %23 = vector.load %arg2[%c4, %c0_22, %c0_23] : memref<9x8x12xbf16, #tpu.memory_space<vmem>>, vector<1x8x12xbf16>
    %24 = vector.shape_cast %23 : vector<1x8x12xbf16> to vector<8x12xbf16>
    %c0_24 = arith.constant 0 : index
    %c0_25 = arith.constant 0 : index
    %c19 = arith.constant 19 : index
    %25 = vector.load %arg4[%c0_24, %c0_25, %c19] : memref<1x12x384xbf16, #tpu.memory_space<vmem>>, vector<1x12x288xbf16>
    %26 = vector.shape_cast %25 : vector<1x12x288xbf16> to vector<12x288xbf16>
    %cst_26 = arith.constant dense<0.000000e+00> : vector<8x288xf32>
    %27 = tpu.matmul %24, %26, %cst_26 {dimension_numbers = #tpu.dot_dimension_numbers<[1], [0], [0], [1], [0, 0, 1, 1], [], []>} : vector<8x12xbf16>, vector<12x288xbf16>, vector<8x288xf32> -> vector<8x288xf32>
    %28 = arith.addf %22, %27 : vector<8x288xf32>
    %c5 = arith.constant 5 : index
    %c0_27 = arith.constant 0 : index
    %c0_28 = arith.constant 0 : index
    %29 = vector.load %arg2[%c5, %c0_27, %c0_28] : memref<9x8x12xbf16, #tpu.memory_space<vmem>>, vector<1x8x12xbf16>
    %30 = vector.shape_cast %29 : vector<1x8x12xbf16> to vector<8x12xbf16>
    %c0_29 = arith.constant 0 : index
    %c0_30 = arith.constant 0 : index
    %c20 = arith.constant 20 : index
    %31 = vector.load %arg4[%c0_29, %c0_30, %c20] : memref<1x12x384xbf16, #tpu.memory_space<vmem>>, vector<1x12x288xbf16>
    %32 = vector.shape_cast %31 : vector<1x12x288xbf16> to vector<12x288xbf16>
    %cst_31 = arith.constant dense<0.000000e+00> : vector<8x288xf32>
    %33 = tpu.matmul %30, %32, %cst_31 {dimension_numbers = #tpu.dot_dimension_numbers<[1], [0], [0], [1], [0, 0, 1, 1], [], []>} : vector<8x12xbf16>, vector<12x288xbf16>, vector<8x288xf32> -> vector<8x288xf32>
    %34 = arith.addf %28, %33 : vector<8x288xf32>
    %c6 = arith.constant 6 : index
    %c0_32 = arith.constant 0 : index
    %c0_33 = arith.constant 0 : index
    %35 = vector.load %arg2[%c6, %c0_32, %c0_33] : memref<9x8x12xbf16, #tpu.memory_space<vmem>>, vector<1x8x12xbf16>
    %36 = vector.shape_cast %35 : vector<1x8x12xbf16> to vector<8x12xbf16>
    %c0_34 = arith.constant 0 : index
    %c0_35 = arith.constant 0 : index
    %c36 = arith.constant 36 : index
    %37 = vector.load %arg4[%c0_34, %c0_35, %c36] : memref<1x12x384xbf16, #tpu.memory_space<vmem>>, vector<1x12x288xbf16>
    %38 = vector.shape_cast %37 : vector<1x12x288xbf16> to vector<12x288xbf16>
    %cst_36 = arith.constant dense<0.000000e+00> : vector<8x288xf32>
    %39 = tpu.matmul %36, %38, %cst_36 {dimension_numbers = #tpu.dot_dimension_numbers<[1], [0], [0], [1], [0, 0, 1, 1], [], []>} : vector<8x12xbf16>, vector<12x288xbf16>, vector<8x288xf32> -> vector<8x288xf32>
    %40 = arith.addf %34, %39 : vector<8x288xf32>
    %c7 = arith.constant 7 : index
    %c0_37 = arith.constant 0 : index
    %c0_38 = arith.constant 0 : index
    %41 = vector.load %arg2[%c7, %c0_37, %c0_38] : memref<9x8x12xbf16, #tpu.memory_space<vmem>>, vector<1x8x12xbf16>
    %42 = vector.shape_cast %41 : vector<1x8x12xbf16> to vector<8x12xbf16>
    %c0_39 = arith.constant 0 : index
    %c0_40 = arith.constant 0 : index
    %c37 = arith.constant 37 : index
    %43 = vector.load %arg4[%c0_39, %c0_40, %c37] : memref<1x12x384xbf16, #tpu.memory_space<vmem>>, vector<1x12x288xbf16>
    %44 = vector.shape_cast %43 : vector<1x12x288xbf16> to vector<12x288xbf16>
    %cst_41 = arith.constant dense<0.000000e+00> : vector<8x288xf32>
    %45 = tpu.matmul %42, %44, %cst_41 {dimension_numbers = #tpu.dot_dimension_numbers<[1], [0], [0], [1], [0, 0, 1, 1], [], []>} : vector<8x12xbf16>, vector<12x288xbf16>, vector<8x288xf32> -> vector<8x288xf32>
    %46 = arith.addf %40, %45 : vector<8x288xf32>
    %c8 = arith.constant 8 : index
    %c0_42 = arith.constant 0 : index
    %c0_43 = arith.constant 0 : index
    %47 = vector.load %arg2[%c8, %c0_42, %c0_43] : memref<9x8x12xbf16, #tpu.memory_space<vmem>>, vector<1x8x12xbf16>
    %48 = vector.shape_cast %47 : vector<1x8x12xbf16> to vector<8x12xbf16>
    %c0_44 = arith.constant 0 : index
    %c0_45 = arith.constant 0 : index
    %c38 = arith.constant 38 : index
    %49 = vector.load %arg4[%c0_44, %c0_45, %c38] : memref<1x12x384xbf16, #tpu.memory_space<vmem>>, vector<1x12x288xbf16>
    %50 = vector.shape_cast %49 : vector<1x12x288xbf16> to vector<12x288xbf16>
    %cst_46 = arith.constant dense<0.000000e+00> : vector<8x288xf32>
    %51 = tpu.matmul %48, %50, %cst_46 {dimension_numbers = #tpu.dot_dimension_numbers<[1], [0], [0], [1], [0, 0, 1, 1], [], []>} : vector<8x12xbf16>, vector<12x288xbf16>, vector<8x288xf32> -> vector<8x288xf32>
    %52 = arith.addf %46, %51 : vector<8x288xf32>
    %c0_47 = arith.constant 0 : index
    %c0_48 = arith.constant 0 : index
    %53 = vector.load %arg3[%c0_47, %c0_48] : memref<8x1xf32, #tpu.memory_space<vmem>>, vector<8x1xf32>
    %54 = vector.broadcast %53 : vector<8x1xf32> to vector<8x288xf32>
    %55 = arith.addf %52, %54 : vector<8x288xf32>
    %c0_49 = arith.constant 0 : index
    %c0_50 = arith.constant 0 : index
    %c0_51 = arith.constant 0 : index
    %56 = vector.load %arg5[%c0_49, %c0_50, %c0_51] : memref<1x8x288xf32, #tpu.memory_space<vmem>>, vector<1x8x288xf32>
    %57 = vector.shape_cast %56 : vector<1x8x288xf32> to vector<8x288xf32>
    %58 = vector.shape_cast %55 : vector<8x288xf32> to vector<1x8x288xf32>
    tpu.vector_store %arg5[%c0_49, %c0_50, %c0_51], %58 {strides = array<i32>} : memref<1x8x288xf32, #tpu.memory_space<vmem>>, vector<1x8x288xf32>,
    return
  }
  func.func @transform_0(%arg0: i32, %arg1: i32) -> (i32, i32, i32) {
    %c0_i32 = arith.constant 0 : i32
    %c0_i32_0 = arith.constant 0 : i32
    %c0_i32_1 = arith.constant 0 : i32
    return %c0_i32, %arg1, %c0_i32_0 : i32, i32, i32
  }
  func.func @transform_1(%arg0: i32, %arg1: i32) -> (i32, i32) {
    %c0_i32 = arith.constant 0 : i32
    %c0_i32_0 = arith.constant 0 : i32
    return %arg1, %c0_i32 : i32, i32
  }
  func.func @transform_2(%arg0: i32, %arg1: i32) -> (i32, i32, i32) {
    %c0_i32 = arith.constant 0 : i32
    %c0_i32_0 = arith.constant 0 : i32
    %c0_i32_1 = arith.constant 0 : i32
    return %arg0, %c0_i32, %c0_i32_0 : i32, i32, i32
  }
  func.func @transform_3(%arg0: i32, %arg1: i32) -> (i32, i32, i32) {
    %c0_i32 = arith.constant 0 : i32
    %c0_i32_0 = arith.constant 0 : i32
    return %arg0, %arg1, %c0_i32 : i32, i32, i32
  }
}

</mosaic_0001>

<llo_original>
// kernel: tpu_custom_call.1
$region0: #{tpu_custom_call.1}
  #allocation0 [shape = 'u32[]', space=smem, size = 0x4, offset = 0x4, fixed_abs, tag = 'smem constant byte address 0x4 - core index']
  #allocation1 [shape = 'u32[72,128]{1,0:T(1,128)}', space=vmem, size = 0x9000, scoped, tag = 'internal scratch']
  %s0 = inlined_call_operand.vmem [shape: bf16[9,8,12], index: 0, kind: input, shape index: {}]
  %s1 = inlined_call_operand.vmem [shape: f32[8,1], index: 1, kind: input, shape index: {}]
  %s2 = inlined_call_operand.vmem [shape: bf16[2,12,384], index: 2, kind: input, shape index: {}]
  %s3 = inlined_call_operand.hbm [shape: f32[2,8,288], index: 3, kind: output, shape index: {}]
  %s4 = sld [smem:[#allocation0]]
  $region45: #{tpu_custom_call.1} parent=0
    _
  %s6 = ssub.s32 1, %s4
  %s7 = scalar_select 0, %s6, %s4
  $region1: #{tpu_custom_call.1} parent=0
    #allocation2 [shape = 'u8[24576]{0}', space=vmem, size = 0x6000, scoped, tag = 'output window, operand 0']
    #allocation3 [shape = 's32[2]{0}', space=sflag, size = 0x8, scoped, tag = 'scoped memory for tpu_custom_call.1']
    %8 = vsyncpa [#allocation3], 0
    %s9 = scalar_lea.sflag [#allocation3], 1
    %10 = vsyncpa %s9, 0
    loop: start=0, step=1, limit=4
    $region2: #{tpu_custom_call.1} parent=1 // loop_pre_header
      _
    $region3: #{tpu_custom_call.1} parent=1 // loop_header
      %s12 = sphi 0, %s16
      %p13 = scmp.ge.s32.totalorder %s12, 4
      %s19 = sphi 0, %s31
      %s20 = sphi 0, %s27
      %s21 = sphi 0, %s19
      %s22 = sphi 0, %s20
      %s23 = sphi 0, %s21
      %s24 = sphi 0, %s22
      %s34 = sphi 0, %s36
      %s37 = sphi 0, %s34
      %s38 = sphi 0, %s37
      %s54 = sphi 0, %s38
      %s60 = sphi 0, %s62
      %s63 = sphi 0, %s60
      %s64 = sphi 0, %s63
      %s80 = sphi 0, %s64
      %s86 = sphi 0, %s88
      %s89 = sphi 0, %s86
      %s90 = sphi 0, %s89
      %s106 = sphi 0, %s90
      %s114 = sphi 0, %s116
      %s117 = sphi 0, %s114
      %s118 = sphi 0, %s117
      %s134 = sphi 0, %s118
    $region4: #{tpu_custom_call.1} parent=1 // loop_header_branch
      %15 = sbr.rel (%p13) target = $region8
    $region5: #{tpu_custom_call.1} parent=1 // loop_body
      %s17 = ssub.s32 %s12, 1
      %s18 = ssub.s32 %s12, 2
      %s25 = sadd.s32 1, %s20
      %p26 = scmp.ge.s32.totalorder %s25, 1
      %s27 = scalar_select %p26, 0, %s25
      %s28 = sadd.s32 1, %s19
      %s29 = scalar_select %p26, %s28, %s19
      %p30 = scmp.ge.s32.totalorder %s29, 2
      %s31 = scalar_select %p30, 0, %s29
      %s32 = ssub.s32 %s20, %s27
      %p33 = scmp.eq.s32.totalorder %s32, 0
      %s35 = sadd.s32 %s34, 1
      %s36 = scalar_select %p33, %s34, %s35
      %p39 = pneg %p33
      %p40 = scmp.eq.s32.totalorder %s12, 1
      %p41 = por %p39, %p40
      %p42 = scmp.ne.s32.totalorder %s34, %s37
      %p43 = scmp.eq.s32.totalorder %s12, 0
      %p44 = por %p42, %p43
      %p45 = scmp.ne.s32.totalorder %s34, %s37
      %p46 = scmp.eq.s32.totalorder %s17, 1
      %p47 = por %p45, %p46
      %p48 = scmp.ne.s32.totalorder %s37, %s38
      %p49 = scmp.eq.s32.totalorder %s17, 0
      %p50 = por %p48, %p49
      %p51 = scmp.ne.s32.totalorder %s37, %s38
      %p52 = scmp.eq.s32.totalorder %s18, 1
      %p53 = por %p51, %p52
      %p55 = scmp.ne.s32.totalorder %s38, %s54
      %p56 = scmp.eq.s32.totalorder %s18, 0
      %p57 = por %p55, %p56
      %s58 = ssub.s32 %s20, %s27
      %p59 = scmp.eq.s32.totalorder %s58, 0
      %s61 = sadd.s32 %s60, 1
      %s62 = scalar_select %p59, %s60, %s61
      %p65 = pneg %p59
      %p66 = scmp.eq.s32.totalorder %s12, 1
      %p67 = por %p65, %p66
      %p68 = scmp.ne.s32.totalorder %s60, %s63
      %p69 = scmp.eq.s32.totalorder %s12, 0
      %p70 = por %p68, %p69
      %p71 = scmp.ne.s32.totalorder %s60, %s63
      %p72 = scmp.eq.s32.totalorder %s17, 1
      %p73 = por %p71, %p72
      %p74 = scmp.ne.s32.totalorder %s63, %s64
      %p75 = scmp.eq.s32.totalorder %s17, 0
      %p76 = por %p74, %p75
      %p77 = scmp.ne.s32.totalorder %s63, %s64
      %p78 = scmp.eq.s32.totalorder %s18, 1
      %p79 = por %p77, %p78
      %p81 = scmp.ne.s32.totalorder %s64, %s80
      %p82 = scmp.eq.s32.totalorder %s18, 0
      %p83 = por %p81, %p82
      %s84 = ssub.s32 %s19, %s31
      %p85 = scmp.eq.s32.totalorder %s84, 0
      %s87 = sadd.s32 %s86, 1
      %s88 = scalar_select %p85, %s86, %s87
      %p91 = pneg %p85
      %p92 = scmp.eq.s32.totalorder %s12, 1
      %p93 = por %p91, %p92
      %p94 = scmp.ne.s32.totalorder %s86, %s89
      %p95 = scmp.eq.s32.totalorder %s12, 0
      %p96 = por %p94, %p95
      %p97 = scmp.ne.s32.totalorder %s86, %s89
      %p98 = scmp.eq.s32.totalorder %s17, 1
      %p99 = por %p97, %p98
      %p100 = scmp.ne.s32.totalorder %s89, %s90
      %p101 = scmp.eq.s32.totalorder %s17, 0
      %p102 = por %p100, %p101
      %p103 = scmp.ne.s32.totalorder %s89, %s90
      %p104 = scmp.eq.s32.totalorder %s18, 1
      %p105 = por %p103, %p104
      %p107 = scmp.ne.s32.totalorder %s90, %s106
      %p108 = scmp.eq.s32.totalorder %s18, 0
      %p109 = por %p107, %p108
      %s110 = ssub.s32 %s19, %s31
      %s111 = ssub.s32 %s20, %s27
      %s112 = sor.u32 %s110, %s111
      %p113 = scmp.eq.s32.totalorder %s112, 0
      %s115 = sadd.s32 %s114, 1
      %s116 = scalar_select %p113, %s114, %s115
      %p119 = pneg %p113
      %p120 = scmp.eq.s32.totalorder %s12, 1
      %p121 = por %p119, %p120
      %p122 = scmp.ne.s32.totalorder %s114, %s117
      %p123 = scmp.eq.s32.totalorder %s12, 0
      %p124 = por %p122, %p123
      %p125 = scmp.ne.s32.totalorder %s114, %s117
      %p126 = scmp.eq.s32.totalorder %s17, 1
      %p127 = por %p125, %p126
      %p128 = scmp.ne.s32.totalorder %s117, %s118
      %p129 = scmp.eq.s32.totalorder %s17, 0
      %p130 = por %p128, %p129
      %p131 = scmp.ne.s32.totalorder %s117, %s118
      %p132 = scmp.eq.s32.totalorder %s18, 1
      %p133 = por %p131, %p132
      %p135 = scmp.ne.s32.totalorder %s118, %s134
      %p136 = scmp.eq.s32.totalorder %s18, 0
      %p137 = por %p135, %p136
      %p138 = scmp.le.s32.totalorder 1, %s12
      %p139 = scmp.lt.s32.totalorder %s12, 3
      %p140 = pnand %p138, %p139
      %p141 = pneg %p140
      // Predicated region
      $region9: #{tpu_custom_call.1} parent=5 // pred_check
        _
      $region10: #{tpu_custom_call.1} parent=5 // pred_check_branch
        %143 = sbr.rel (%p140) target = $region12
      $region11: #{tpu_custom_call.1} parent=5 // pred_region
        %s144 = ssub.s32 %s12, 1
        // Predicated region
        $region13: #{tpu_custom_call.1} parent=11 // pred_check
          %p145 = pneg %p50
        $region14: #{tpu_custom_call.1} parent=11 // pred_check_branch
          %147 = sbr.rel (%p145) target = $region16
        $region15: #{tpu_custom_call.1} parent=11 // pred_region
          %p148 = scmp.lt.s32.totalorder %s22, 0
          %s149 = scalar_select %p148, %s22, 0
          %s150 = smul.addr %s149, 4
          %s151 = scalar_lea.vmem %s0, %s150
        $region16: #{tpu_custom_call.1} parent=11 // pred_fallthru
          _
        // Predicated region
        $region17: #{tpu_custom_call.1} parent=11 // pred_check
          %p152 = pneg %p76
        $region18: #{tpu_custom_call.1} parent=11 // pred_check_branch
          %154 = sbr.rel (%p152) target = $region20
        $region19: #{tpu_custom_call.1} parent=11 // pred_region
          %p155 = scmp.lt.s32.totalorder %s22, 0
          %s156 = scalar_select %p155, %s22, 0
          %s157 = smul.addr %s156, 8
          %s158 = scalar_lea.vmem %s1, %s157
        $region20: #{tpu_custom_call.1} parent=11 // pred_fallthru
          _
      $region12: #{tpu_custom_call.1} parent=5 // pred_fallthru
        _
      %p159 = scmp.lt.s32.totalorder %s12, 2
      // Predicated region
      $region21: #{tpu_custom_call.1} parent=5 // pred_check
        %p160 = pneg %p159
      $region22: #{tpu_custom_call.1} parent=5 // pred_check_branch
        %162 = sbr.rel (%p160) target = $region24
      $region23: #{tpu_custom_call.1} parent=5 // pred_region
        // Predicated region
        $region25: #{tpu_custom_call.1} parent=23 // pred_check
          %p163 = pneg %p96
        $region26: #{tpu_custom_call.1} parent=23 // pred_check_branch
          %165 = sbr.rel (%p163) target = $region28
        $region27: #{tpu_custom_call.1} parent=23 // pred_region
          %p166 = scmp.lt.s32.totalorder %s19, 1
          %s167 = scalar_select %p166, %s19, 1
          %s168 = smul.addr %s167, 6
          %s169 = smul.addr %s168, 4
          %s170 = scalar_lea.vmem %s2, %s169
        $region28: #{tpu_custom_call.1} parent=23 // pred_fallthru
          _
      $region24: #{tpu_custom_call.1} parent=5 // pred_fallthru
        _
      %p171 = scmp.le.s32.totalorder 1, %s12
      %p172 = scmp.lt.s32.totalorder %s12, 3
      %p173 = pnand %p171, %p172
      %p174 = pneg %p173
      // Predicated region
      $region29: #{tpu_custom_call.1} parent=5 // pred_check
        _
      $region30: #{tpu_custom_call.1} parent=5 // pred_check_branch
        %176 = sbr.rel (%p173) target = $region32
      $region31: #{tpu_custom_call.1} parent=5 // pred_region
        %s177 = ssub.s32 %s12, 1
        %p178 = scmp.lt.s32.totalorder %s22, 0
        %s179 = scalar_select %p178, %s22, 0
        %s180 = smul.addr %s179, 4
        %s181 = scalar_lea.vmem %s0, %s180
        %p182 = pneg %p50
        %p183 = pneg %p47
        %p184 = scmp.lt.s32.totalorder %s22, 0
        %s185 = scalar_select %p184, %s22, 0
        %s186 = smul.addr %s185, 8
        %s187 = scalar_lea.vmem %s1, %s186
        %p188 = pneg %p76
        %p189 = pneg %p73
        %p190 = scmp.lt.s32.totalorder %s21, 1
        %s191 = scalar_select %p190, %s21, 1
        %s192 = smul.addr %s191, 6
        %s193 = smul.addr %s192, 4
        %s194 = scalar_lea.vmem %s2, %s193
        %p195 = pneg %p102
        %p196 = pneg %p99
        %p197 = pneg %p130
        %p198 = pneg %p127
        %s199 = sand.u32 %s117, 1
        %s200 = scalar_lea.sflag [#allocation3], %s199
        %s201 = sand.u32 %s117, 1
        %s202 = smul.addr %s201, 24
        %s203 = scalar_lea.vmem [#allocation2], %s202
        %p204 = scmp.lt.s32.totalorder %s22, 0
        %s205 = scalar_select %p204, %s22, 0
        %s206 = smul.addr %s205, 4
        %s207 = scalar_lea.vmem %s0, %s206
        %p208 = scmp.lt.s32.totalorder %s22, 0
        %s209 = scalar_select %p208, %s22, 0
        %s210 = smul.addr %s209, 8
        %s211 = scalar_lea.vmem %s1, %s210
        %p212 = scmp.lt.s32.totalorder %s21, 1
        %s213 = scalar_select %p212, %s21, 1
        %s214 = smul.addr %s213, 6
        %s215 = smul.addr %s214, 4
        %s216 = scalar_lea.vmem %s2, %s215
        %v218 = vld [vmem:[%s207] sm:$0xf]
        %v219 = vld [vmem:[%s216] sm:$0xff]
        %v220 = vld [vmem:[%s216 + $0x8] sm:$0xf]
        %v221 = vld [vmem:[%s216 + $0xc] sm:$0x33]
        %v222 = vld [vmem:[%s216 + $0x14] sm:$0x3]
        %s223 = scalar_lea.vmem %s207, 4
        %v224 = vld [vmem:[%s223] sm:$0xf]
        %v229 = vunpack.c.l.b16 %v219
        %v230 = vunpack.c.h.b16 %v219
        %v231 = vunpack.c.l.b16 %v220
        %v232 = vunpack.c.l.b16 %v221
        %v233 = vunpack.c.h.b16 %v221
        %v234 = vunpack.c.l.b16 %v222
        %v235 = vpack.c.b16 %v232, %v229
        %v236 = vpack.c.b16 %v233, %v230
        %v237 = vpack.c.b16 %v234, %v231
        %238 = vrot.lane.b32.xlu0 %v235, 127
        %v239 = vpop.permute.xlu0 %238
        %240 = vrot.lane.b32.xlu0 %v236, 127
        %v241 = vpop.permute.xlu0 %240
        %242 = vrot.lane.b32.xlu0 %v237, 127
        %v243 = vpop.permute.xlu0 %242
        %vm244 = vcmask 1039360
        %v245 = vsel %vm244, %v239, %v241
        %v246 = vsel %vm244, %v241, %v243
        %vm247 = vcmask 97280
        %v249 = vsel %vm247, %v224, 0
        %vm251 = vcmask 1045504
        %v253 = vsel %vm251, %v245, 0
        %v256 = vsel %vm251, %v246, 0
        %v259 = vsel %vm251, %v243, 0
        %261 = vmatpush.bf16.msra.mxu0 0
        %262 = vmatpush.bf16.msra.mxu0 0
        %263 = vmatpush.bf16.msra.mxu0 0
        %264 = vmatpush.bf16.msra.mxu0 0
        %265 = vmatpush.bf16.msra.mxu0 0
        %266 = vmatpush.bf16.msra.mxu0 0
        %267 = vmatpush.bf16.msra.mxu0 0
        %268 = vmatpush.bf16.msra.mxu0 %v253
        %269 = vmatmul.bf16.gmra.mxu0 %v249
        %v270 = vpop.f32.mrf.mxu0
        %v271 = vadd.f32 0.0, %v270
        %v272 = vpop.f32.mrf.mxu0
        %273 = vdwg.mxu0
        %274 = vmatpush.bf16.msra.mxu0 0
        %275 = vmatpush.bf16.msra.mxu0 0
        %276 = vmatpush.bf16.msra.mxu0 0
        %277 = vmatpush.bf16.msra.mxu0 0
        %278 = vmatpush.bf16.msra.mxu0 0
        %279 = vmatpush.bf16.msra.mxu0 0
        %280 = vmatpush.bf16.msra.mxu0 0
        %281 = vmatpush.bf16.msra.mxu0 %v256
        %282 = vmatmul.bf16.gmra.mxu0 %v249
        %v283 = vpop.f32.mrf.mxu0
        %v284 = vadd.f32 0.0, %v283
        %v285 = vpop.f32.mrf.mxu0
        %286 = vdwg.mxu0
        %287 = vmatpush.bf16.msra.mxu0 0
        %288 = vmatpush.bf16.msra.mxu0 0
        %289 = vmatpush.bf16.msra.mxu0 0
        %290 = vmatpush.bf16.msra.mxu0 0
        %291 = vmatpush.bf16.msra.mxu0 0
        %292 = vmatpush.bf16.msra.mxu0 0
        %293 = vmatpush.bf16.msra.mxu0 0
        %294 = vmatpush.bf16.msra.mxu0 %v259
        %295 = vmatmul.bf16.gmra.mxu0 %v249
        %v296 = vpop.f32.mrf.mxu0
        %v297 = vadd.f32 0.0, %v296
        %v298 = vpop.f32.mrf.mxu0
        %299 = vdwg.mxu0
        %v301 = vsel %vm247, %v218, 0
        %v304 = vsel %vm251, %v235, 0
        %v307 = vsel %vm251, %v236, 0
        %v310 = vsel %vm251, %v237, 0
        %312 = vmatpush.bf16.msra.mxu0 0
        %313 = vmatpush.bf16.msra.mxu0 0
        %314 = vmatpush.bf16.msra.mxu0 0
        %315 = vmatpush.bf16.msra.mxu0 0
        %316 = vmatpush.bf16.msra.mxu0 0
        %317 = vmatpush.bf16.msra.mxu0 0
        %318 = vmatpush.bf16.msra.mxu0 0
        %319 = vmatpush.bf16.msra.mxu0 %v304
        %320 = vmatmul.bf16.gmra.mxu0 %v301
        %v321 = vpop.f32.mrf.mxu0
        %v322 = vadd.f32 %v271, %v321
        %v323 = vpop.f32.mrf.mxu0
        %324 = vdwg.mxu0
        %325 = vmatpush.bf16.msra.mxu0 0
        %326 = vmatpush.bf16.msra.mxu0 0
        %327 = vmatpush.bf16.msra.mxu0 0
        %328 = vmatpush.bf16.msra.mxu0 0
        %329 = vmatpush.bf16.msra.mxu0 0
        %330 = vmatpush.bf16.msra.mxu0 0
        %331 = vmatpush.bf16.msra.mxu0 0
        %332 = vmatpush.bf16.msra.mxu0 %v307
        %333 = vmatmul.bf16.gmra.mxu0 %v301
        %v334 = vpop.f32.mrf.mxu0
        %v335 = vadd.f32 %v284, %v334
        %v336 = vpop.f32.mrf.mxu0
        %337 = vdwg.mxu0
        %338 = vmatpush.bf16.msra.mxu0 0
        %339 = vmatpush.bf16.msra.mxu0 0
        %340 = vmatpush.bf16.msra.mxu0 0
        %341 = vmatpush.bf16.msra.mxu0 0
        %342 = vmatpush.bf16.msra.mxu0 0
        %343 = vmatpush.bf16.msra.mxu0 0
        %344 = vmatpush.bf16.msra.mxu0 0
        %345 = vmatpush.bf16.msra.mxu0 %v310
        %346 = vmatmul.bf16.gmra.mxu0 %v301
        %v347 = vpop.f32.mrf.mxu0
        %v348 = vadd.f32 %v297, %v347
        %v349 = vpop.f32.mrf.mxu0
        %350 = vdwg.mxu0
        %s351 = scalar_lea.vmem %s207, 8
        %v352 = vld [vmem:[%s351] sm:$0xf]
        %353 = vrot.lane.b32.xlu0 %v235, 126
        %v354 = vpop.permute.xlu0 %353
        %355 = vrot.lane.b32.xlu0 %v236, 126
        %v356 = vpop.permute.xlu0 %355
        %357 = vrot.lane.b32.xlu0 %v237, 126
        %v358 = vpop.permute.xlu0 %357
        %vm359 = vcmask 1031168
        %v360 = vsel %vm359, %v354, %v356
        %v361 = vsel %vm359, %v356, %v358
        %v363 = vsel %vm247, %v352, 0
        %v366 = vsel %vm251, %v360, 0
        %v369 = vsel %vm251, %v361, 0
        %v372 = vsel %vm251, %v358, 0
        %374 = vmatpush.bf16.msra.mxu0 0
        %375 = vmatpush.bf16.msra.mxu0 0
        %376 = vmatpush.bf16.msra.mxu0 0
        %377 = vmatpush.bf16.msra.mxu0 0
        %378 = vmatpush.bf16.msra.mxu0 0
        %379 = vmatpush.bf16.msra.mxu0 0
        %380 = vmatpush.bf16.msra.mxu0 0
        %381 = vmatpush.bf16.msra.mxu0 %v366
        %382 = vmatmul.bf16.gmra.mxu0 %v363
        %v383 = vpop.f32.mrf.mxu0
        %v384 = vadd.f32 0.0, %v383
        %v385 = vpop.f32.mrf.mxu0
        %386 = vdwg.mxu0
        %387 = vmatpush.bf16.msra.mxu0 0
        %388 = vmatpush.bf16.msra.mxu0 0
        %389 = vmatpush.bf16.msra.mxu0 0
        %390 = vmatpush.bf16.msra.mxu0 0
        %391 = vmatpush.bf16.msra.mxu0 0
        %392 = vmatpush.bf16.msra.mxu0 0
        %393 = vmatpush.bf16.msra.mxu0 0
        %394 = vmatpush.bf16.msra.mxu0 %v369
        %395 = vmatmul.bf16.gmra.mxu0 %v363
        %v396 = vpop.f32.mrf.mxu0
        %v397 = vadd.f32 0.0, %v396
        %v398 = vpop.f32.mrf.mxu0
        %399 = vdwg.mxu0
        %400 = vmatpush.bf16.msra.mxu0 0
        %401 = vmatpush.bf16.msra.mxu0 0
        %402 = vmatpush.bf16.msra.mxu0 0
        %403 = vmatpush.bf16.msra.mxu0 0
        %404 = vmatpush.bf16.msra.mxu0 0
        %405 = vmatpush.bf16.msra.mxu0 0
        %406 = vmatpush.bf16.msra.mxu0 0
        %407 = vmatpush.bf16.msra.mxu0 %v372
        %408 = vmatmul.bf16.gmra.mxu0 %v363
        %v409 = vpop.f32.mrf.mxu0
        %v410 = vadd.f32 0.0, %v409
        %v411 = vpop.f32.mrf.mxu0
        %412 = vdwg.mxu0
        %v413 = vadd.f32 %v322, %v384
        %v414 = vadd.f32 %v335, %v397
        %v415 = vadd.f32 %v348, %v410
        %s416 = scalar_lea.vmem %s207, 12
        %v417 = vld [vmem:[%s416] sm:$0xf]
        %418 = vrot.lane.b32.xlu0 %v235, 110
        %v419 = vpop.permute.xlu0 %418
        %420 = vrot.lane.b32.xlu0 %v236, 110
        %v421 = vpop.permute.xlu0 %420
        %422 = vrot.lane.b32.xlu0 %v237, 110
        %v423 = vpop.permute.xlu0 %422
        %vm424 = vcmask 900096
        %v425 = vsel %vm424, %v419, %v421
        %v426 = vsel %vm424, %v421, %v423
        %v428 = vsel %vm247, %v417, 0
        %v431 = vsel %vm251, %v425, 0
        %v434 = vsel %vm251, %v426, 0
        %v437 = vsel %vm251, %v423, 0
        %439 = vmatpush.bf16.msra.mxu0 0
        %440 = vmatpush.bf16.msra.mxu0 0
        %441 = vmatpush.bf16.msra.mxu0 0
        %442 = vmatpush.bf16.msra.mxu0 0
        %443 = vmatpush.bf16.msra.mxu0 0
        %444 = vmatpush.bf16.msra.mxu0 0
        %445 = vmatpush.bf16.msra.mxu0 0
        %446 = vmatpush.bf16.msra.mxu0 %v431
        %447 = vmatmul.bf16.gmra.mxu0 %v428
        %v448 = vpop.f32.mrf.mxu0
        %v449 = vadd.f32 0.0, %v448
        %v450 = vpop.f32.mrf.mxu0
        %451 = vdwg.mxu0
        %452 = vmatpush.bf16.msra.mxu0 0
        %453 = vmatpush.bf16.msra.mxu0 0
        %454 = vmatpush.bf16.msra.mxu0 0
        %455 = vmatpush.bf16.msra.mxu0 0
        %456 = vmatpush.bf16.msra.mxu0 0
        %457 = vmatpush.bf16.msra.mxu0 0
        %458 = vmatpush.bf16.msra.mxu0 0
        %459 = vmatpush.bf16.msra.mxu0 %v434
        %460 = vmatmul.bf16.gmra.mxu0 %v428
        %v461 = vpop.f32.mrf.mxu0
        %v462 = vadd.f32 0.0, %v461
        %v463 = vpop.f32.mrf.mxu0
        %464 = vdwg.mxu0
        %465 = vmatpush.bf16.msra.mxu0 0
        %466 = vmatpush.bf16.msra.mxu0 0
        %467 = vmatpush.bf16.msra.mxu0 0
        %468 = vmatpush.bf16.msra.mxu0 0
        %469 = vmatpush.bf16.msra.mxu0 0
        %470 = vmatpush.bf16.msra.mxu0 0
        %471 = vmatpush.bf16.msra.mxu0 0
        %472 = vmatpush.bf16.msra.mxu0 %v437
        %473 = vmatmul.bf16.gmra.mxu0 %v428
        %v474 = vpop.f32.mrf.mxu0
        %v475 = vadd.f32 0.0, %v474
        %v476 = vpop.f32.mrf.mxu0
        %477 = vdwg.mxu0
        %v478 = vadd.f32 %v413, %v449
        %v479 = vadd.f32 %v414, %v462
        %v480 = vadd.f32 %v415, %v475
        %s481 = scalar_lea.vmem %s207, 16
        %v482 = vld [vmem:[%s481] sm:$0xf]
        %483 = vrot.lane.b32.xlu0 %v235, 109
        %v484 = vpop.permute.xlu0 %483
        %485 = vrot.lane.b32.xlu0 %v236, 109
        %v486 = vpop.permute.xlu0 %485
        %487 = vrot.lane.b32.xlu0 %v237, 109
        %v488 = vpop.permute.xlu0 %487
        %vm489 = vcmask 891904
        %v490 = vsel %vm489, %v484, %v486
        %v491 = vsel %vm489, %v486, %v488
        %v493 = vsel %vm247, %v482, 0
        %v496 = vsel %vm251, %v490, 0
        %v499 = vsel %vm251, %v491, 0
        %v502 = vsel %vm251, %v488, 0
        %504 = vmatpush.bf16.msra.mxu0 0
        %505 = vmatpush.bf16.msra.mxu0 0
        %506 = vmatpush.bf16.msra.mxu0 0
        %507 = vmatpush.bf16.msra.mxu0 0
        %508 = vmatpush.bf16.msra.mxu0 0
        %509 = vmatpush.bf16.msra.mxu0 0
        %510 = vmatpush.bf16.msra.mxu0 0
        %511 = vmatpush.bf16.msra.mxu0 %v496
        %512 = vmatmul.bf16.gmra.mxu0 %v493
        %v513 = vpop.f32.mrf.mxu0
        %v514 = vadd.f32 0.0, %v513
        %v515 = vpop.f32.mrf.mxu0
        %516 = vdwg.mxu0
        %517 = vmatpush.bf16.msra.mxu0 0
        %518 = vmatpush.bf16.msra.mxu0 0
        %519 = vmatpush.bf16.msra.mxu0 0
        %520 = vmatpush.bf16.msra.mxu0 0
        %521 = vmatpush.bf16.msra.mxu0 0
        %522 = vmatpush.bf16.msra.mxu0 0
        %523 = vmatpush.bf16.msra.mxu0 0
        %524 = vmatpush.bf16.msra.mxu0 %v499
        %525 = vmatmul.bf16.gmra.mxu0 %v493
        %v526 = vpop.f32.mrf.mxu0
        %v527 = vadd.f32 0.0, %v526
        %v528 = vpop.f32.mrf.mxu0
        %529 = vdwg.mxu0
        %530 = vmatpush.bf16.msra.mxu0 0
        %531 = vmatpush.bf16.msra.mxu0 0
        %532 = vmatpush.bf16.msra.mxu0 0
        %533 = vmatpush.bf16.msra.mxu0 0
        %534 = vmatpush.bf16.msra.mxu0 0
        %535 = vmatpush.bf16.msra.mxu0 0
        %536 = vmatpush.bf16.msra.mxu0 0
        %537 = vmatpush.bf16.msra.mxu0 %v502
        %538 = vmatmul.bf16.gmra.mxu0 %v493
        %v539 = vpop.f32.mrf.mxu0
        %v540 = vadd.f32 0.0, %v539
        %v541 = vpop.f32.mrf.mxu0
        %542 = vdwg.mxu0
        %v543 = vadd.f32 %v478, %v514
        %v544 = vadd.f32 %v479, %v527
        %v545 = vadd.f32 %v480, %v540
        %s546 = scalar_lea.vmem %s207, 20
        %v547 = vld [vmem:[%s546] sm:$0xf]
        %548 = vrot.lane.b32.xlu0 %v235, 108
        %v549 = vpop.permute.xlu0 %548
        %550 = vrot.lane.b32.xlu0 %v236, 108
        %v551 = vpop.permute.xlu0 %550
        %552 = vrot.lane.b32.xlu0 %v237, 108
        %v553 = vpop.permute.xlu0 %552
        %vm554 = vcmask 883712
        %v555 = vsel %vm554, %v549, %v551
        %v556 = vsel %vm554, %v551, %v553
        %v558 = vsel %vm247, %v547, 0
        %v561 = vsel %vm251, %v555, 0
        %v564 = vsel %vm251, %v556, 0
        %v567 = vsel %vm251, %v553, 0
        %569 = vmatpush.bf16.msra.mxu0 0
        %570 = vmatpush.bf16.msra.mxu0 0
        %571 = vmatpush.bf16.msra.mxu0 0
        %572 = vmatpush.bf16.msra.mxu0 0
        %573 = vmatpush.bf16.msra.mxu0 0
        %574 = vmatpush.bf16.msra.mxu0 0
        %575 = vmatpush.bf16.msra.mxu0 0
        %576 = vmatpush.bf16.msra.mxu0 %v561
        %577 = vmatmul.bf16.gmra.mxu0 %v558
        %v578 = vpop.f32.mrf.mxu0
        %v579 = vadd.f32 0.0, %v578
        %v580 = vpop.f32.mrf.mxu0
        %581 = vdwg.mxu0
        %582 = vmatpush.bf16.msra.mxu0 0
        %583 = vmatpush.bf16.msra.mxu0 0
        %584 = vmatpush.bf16.msra.mxu0 0
        %585 = vmatpush.bf16.msra.mxu0 0
        %586 = vmatpush.bf16.msra.mxu0 0
        %587 = vmatpush.bf16.msra.mxu0 0
        %588 = vmatpush.bf16.msra.mxu0 0
        %589 = vmatpush.bf16.msra.mxu0 %v564
        %590 = vmatmul.bf16.gmra.mxu0 %v558
        %v591 = vpop.f32.mrf.mxu0
        %v592 = vadd.f32 0.0, %v591
        %v593 = vpop.f32.mrf.mxu0
        %594 = vdwg.mxu0
        %595 = vmatpush.bf16.msra.mxu0 0
        %596 = vmatpush.bf16.msra.mxu0 0
        %597 = vmatpush.bf16.msra.mxu0 0
        %598 = vmatpush.bf16.msra.mxu0 0
        %599 = vmatpush.bf16.msra.mxu0 0
        %600 = vmatpush.bf16.msra.mxu0 0
        %601 = vmatpush.bf16.msra.mxu0 0
        %602 = vmatpush.bf16.msra.mxu0 %v567
        %603 = vmatmul.bf16.gmra.mxu0 %v558
        %v604 = vpop.f32.mrf.mxu0
        %v605 = vadd.f32 0.0, %v604
        %v606 = vpop.f32.mrf.mxu0
        %607 = vdwg.mxu0
        %v608 = vadd.f32 %v543, %v579
        %v609 = vadd.f32 %v544, %v592
        %v610 = vadd.f32 %v545, %v605
        %s611 = scalar_lea.vmem %s207, 24
        %v612 = vld [vmem:[%s611] sm:$0xf]
        %613 = vrot.lane.b32.xlu0 %v235, 92
        %v614 = vpop.permute.xlu0 %613
        %615 = vrot.lane.b32.xlu0 %v236, 92
        %v616 = vpop.permute.xlu0 %615
        %617 = vrot.lane.b32.xlu0 %v237, 92
        %v618 = vpop.permute.xlu0 %617
        %vm619 = vcmask 752640
        %v620 = vsel %vm619, %v614, %v616
        %v621 = vsel %vm619, %v616, %v618
        %v623 = vsel %vm247, %v612, 0
        %v626 = vsel %vm251, %v620, 0
        %v629 = vsel %vm251, %v621, 0
        %v632 = vsel %vm251, %v618, 0
        %634 = vmatpush.bf16.msra.mxu0 0
        %635 = vmatpush.bf16.msra.mxu0 0
        %636 = vmatpush.bf16.msra.mxu0 0
        %637 = vmatpush.bf16.msra.mxu0 0
        %638 = vmatpush.bf16.msra.mxu0 0
        %639 = vmatpush.bf16.msra.mxu0 0
        %640 = vmatpush.bf16.msra.mxu0 0
        %641 = vmatpush.bf16.msra.mxu0 %v626
        %642 = vmatmul.bf16.gmra.mxu0 %v623
        %v643 = vpop.f32.mrf.mxu0
        %v644 = vadd.f32 0.0, %v643
        %v645 = vpop.f32.mrf.mxu0
        %646 = vdwg.mxu0
        %647 = vmatpush.bf16.msra.mxu0 0
        %648 = vmatpush.bf16.msra.mxu0 0
        %649 = vmatpush.bf16.msra.mxu0 0
        %650 = vmatpush.bf16.msra.mxu0 0
        %651 = vmatpush.bf16.msra.mxu0 0
        %652 = vmatpush.bf16.msra.mxu0 0
        %653 = vmatpush.bf16.msra.mxu0 0
        %654 = vmatpush.bf16.msra.mxu0 %v629
        %655 = vmatmul.bf16.gmra.mxu0 %v623
        %v656 = vpop.f32.mrf.mxu0
        %v657 = vadd.f32 0.0, %v656
        %v658 = vpop.f32.mrf.mxu0
        %659 = vdwg.mxu0
        %660 = vmatpush.bf16.msra.mxu0 0
        %661 = vmatpush.bf16.msra.mxu0 0
        %662 = vmatpush.bf16.msra.mxu0 0
        %663 = vmatpush.bf16.msra.mxu0 0
        %664 = vmatpush.bf16.msra.mxu0 0
        %665 = vmatpush.bf16.msra.mxu0 0
        %666 = vmatpush.bf16.msra.mxu0 0
        %667 = vmatpush.bf16.msra.mxu0 %v632
        %668 = vmatmul.bf16.gmra.mxu0 %v623
        %v669 = vpop.f32.mrf.mxu0
        %v670 = vadd.f32 0.0, %v669
        %v671 = vpop.f32.mrf.mxu0
        %672 = vdwg.mxu0
        %v673 = vadd.f32 %v608, %v644
        %v674 = vadd.f32 %v609, %v657
        %v675 = vadd.f32 %v610, %v670
        %s676 = scalar_lea.vmem %s207, 28
        %v677 = vld [vmem:[%s676] sm:$0xf]
        %678 = vrot.lane.b32.xlu0 %v235, 91
        %v679 = vpop.permute.xlu0 %678
        %680 = vrot.lane.b32.xlu0 %v236, 91
        %v681 = vpop.permute.xlu0 %680
        %682 = vrot.lane.b32.xlu0 %v237, 91
        %v683 = vpop.permute.xlu0 %682
        %vm684 = vcmask 744448
        %v685 = vsel %vm684, %v679, %v681
        %v686 = vsel %vm684, %v681, %v683
        %v688 = vsel %vm247, %v677, 0
        %v691 = vsel %vm251, %v685, 0
        %v694 = vsel %vm251, %v686, 0
        %v697 = vsel %vm251, %v683, 0
        %699 = vmatpush.bf16.msra.mxu0 0
        %700 = vmatpush.bf16.msra.mxu0 0
        %701 = vmatpush.bf16.msra.mxu0 0
        %702 = vmatpush.bf16.msra.mxu0 0
        %703 = vmatpush.bf16.msra.mxu0 0
        %704 = vmatpush.bf16.msra.mxu0 0
        %705 = vmatpush.bf16.msra.mxu0 0
        %706 = vmatpush.bf16.msra.mxu0 %v691
        %707 = vmatmul.bf16.gmra.mxu0 %v688
        %v708 = vpop.f32.mrf.mxu0
        %v709 = vadd.f32 0.0, %v708
        %v710 = vpop.f32.mrf.mxu0
        %711 = vdwg.mxu0
        %712 = vmatpush.bf16.msra.mxu0 0
        %713 = vmatpush.bf16.msra.mxu0 0
        %714 = vmatpush.bf16.msra.mxu0 0
        %715 = vmatpush.bf16.msra.mxu0 0
        %716 = vmatpush.bf16.msra.mxu0 0
        %717 = vmatpush.bf16.msra.mxu0 0
        %718 = vmatpush.bf16.msra.mxu0 0
        %719 = vmatpush.bf16.msra.mxu0 %v694
        %720 = vmatmul.bf16.gmra.mxu0 %v688
        %v721 = vpop.f32.mrf.mxu0
        %v722 = vadd.f32 0.0, %v721
        %v723 = vpop.f32.mrf.mxu0
        %724 = vdwg.mxu0
        %725 = vmatpush.bf16.msra.mxu0 0
        %726 = vmatpush.bf16.msra.mxu0 0
        %727 = vmatpush.bf16.msra.mxu0 0
        %728 = vmatpush.bf16.msra.mxu0 0
        %729 = vmatpush.bf16.msra.mxu0 0
        %730 = vmatpush.bf16.msra.mxu0 0
        %731 = vmatpush.bf16.msra.mxu0 0
        %732 = vmatpush.bf16.msra.mxu0 %v697
        %733 = vmatmul.bf16.gmra.mxu0 %v688
        %v734 = vpop.f32.mrf.mxu0
        %v735 = vadd.f32 0.0, %v734
        %v736 = vpop.f32.mrf.mxu0
        %737 = vdwg.mxu0
        %v738 = vadd.f32 %v673, %v709
        %v739 = vadd.f32 %v674, %v722
        %v740 = vadd.f32 %v675, %v735
        %s741 = scalar_lea.vmem %s207, 32
        %v742 = vld [vmem:[%s741] sm:$0xf]
        %743 = vrot.lane.b32.xlu0 %v235, 90
        %v744 = vpop.permute.xlu0 %743
        %745 = vrot.lane.b32.xlu0 %v236, 90
        %v746 = vpop.permute.xlu0 %745
        %747 = vrot.lane.b32.xlu0 %v237, 90
        %v748 = vpop.permute.xlu0 %747
        %vm749 = vcmask 736256
        %v750 = vsel %vm749, %v744, %v746
        %v751 = vsel %vm749, %v746, %v748
        %v753 = vsel %vm247, %v742, 0
        %v756 = vsel %vm251, %v750, 0
        %v759 = vsel %vm251, %v751, 0
        %v762 = vsel %vm251, %v748, 0
        %764 = vmatpush.bf16.msra.mxu0 0
        %765 = vmatpush.bf16.msra.mxu0 0
        %766 = vmatpush.bf16.msra.mxu0 0
        %767 = vmatpush.bf16.msra.mxu0 0
        %768 = vmatpush.bf16.msra.mxu0 0
        %769 = vmatpush.bf16.msra.mxu0 0
        %770 = vmatpush.bf16.msra.mxu0 0
        %771 = vmatpush.bf16.msra.mxu0 %v756
        %772 = vmatmul.bf16.gmra.mxu0 %v753
        %v773 = vpop.f32.mrf.mxu0
        %v774 = vadd.f32 0.0, %v773
        %v775 = vpop.f32.mrf.mxu0
        %776 = vdwg.mxu0
        %777 = vmatpush.bf16.msra.mxu0 0
        %778 = vmatpush.bf16.msra.mxu0 0
        %779 = vmatpush.bf16.msra.mxu0 0
        %780 = vmatpush.bf16.msra.mxu0 0
        %781 = vmatpush.bf16.msra.mxu0 0
        %782 = vmatpush.bf16.msra.mxu0 0
        %783 = vmatpush.bf16.msra.mxu0 0
        %784 = vmatpush.bf16.msra.mxu0 %v759
        %785 = vmatmul.bf16.gmra.mxu0 %v753
        %v786 = vpop.f32.mrf.mxu0
        %v787 = vadd.f32 0.0, %v786
        %v788 = vpop.f32.mrf.mxu0
        %789 = vdwg.mxu0
        %790 = vmatpush.bf16.msra.mxu0 0
        %791 = vmatpush.bf16.msra.mxu0 0
        %792 = vmatpush.bf16.msra.mxu0 0
        %793 = vmatpush.bf16.msra.mxu0 0
        %794 = vmatpush.bf16.msra.mxu0 0
        %795 = vmatpush.bf16.msra.mxu0 0
        %796 = vmatpush.bf16.msra.mxu0 0
        %797 = vmatpush.bf16.msra.mxu0 %v762
        %798 = vmatmul.bf16.gmra.mxu0 %v753
        %v799 = vpop.f32.mrf.mxu0
        %v800 = vadd.f32 0.0, %v799
        %v801 = vpop.f32.mrf.mxu0
        %802 = vdwg.mxu0
        %v803 = vadd.f32 %v738, %v774
        %v804 = vadd.f32 %v739, %v787
        %v805 = vadd.f32 %v740, %v800
        %v806 = vld [vmem:[%s211] sm:$0xff]
        %808 = vset.pattern.permute.xlu0 0
        %809 = vperm.xlu0 %808, %v806
        %v810 = vpop.permute.xlu0 %809
        %v812 = vadd.f32 %v803, %v810
        %v813 = vadd.f32 %v804, %v810
        %v814 = vadd.f32 %v805, %v810
        %815 = vst [vmem:[%s203] sm:$0xff] %v812
        %816 = vst [vmem:[%s203 + $0x8] sm:$0xff] %v813
        %vm817 = vcmask 261120
        %818 = vst.msk [vmem:[%s203 + $0x10] sm:$0xff] %vm817, %v814
        %s819 = sand.u32 %s117, 1
        %s820 = scalar_lea.sflag [#allocation3], %s819
        %s821 = sand.u32 %s117, 1
        %s822 = smul.addr %s821, 24
        %s823 = scalar_lea.vmem [#allocation2], %s822
        // Predicated region
        $region33: #{tpu_custom_call.1} parent=31 // pred_check
          %p824 = pneg %p127
        $region34: #{tpu_custom_call.1} parent=31 // pred_check_branch
          %826 = sbr.rel (%p824) target = $region36
        $region35: #{tpu_custom_call.1} parent=31 // pred_region
          %828 = vsyncadd %s820, 0
          %s829 = smul.addr %s22, 3
          %s830 = smul.addr %s21, 3
          %s831 = sadd.s32 %s829, %s830
          %s832 = smul.addr %s831, 8
          %s833 = scalar_lea.hbm %s3, %s832
          %s835 = sshll.u32 %s823, 4
          %s836 = int_to_ptr.vmem [resolvable:$true] %s835
          %s837 = sshll.u32 %s833, 4
          %s838 = int_to_ptr.hbm [resolvable:$true] %s837
          %840 = dma.vmem_to_hbm [thread:$0]  %s836, 384, %s838, %s820
        $region36: #{tpu_custom_call.1} parent=31 // pred_fallthru
          _
      $region32: #{tpu_custom_call.1} parent=5 // pred_fallthru
        _
      %p841 = scmp.le.s32.totalorder 2, %s12
      // Predicated region
      $region37: #{tpu_custom_call.1} parent=5 // pred_check
        %p842 = pneg %p841
      $region38: #{tpu_custom_call.1} parent=5 // pred_check_branch
        %844 = sbr.rel (%p842) target = $region40
      $region39: #{tpu_custom_call.1} parent=5 // pred_region
        %s845 = ssub.s32 %s12, 2
        // Predicated region
        $region41: #{tpu_custom_call.1} parent=39 // pred_check
          %p846 = pneg %p133
        $region42: #{tpu_custom_call.1} parent=39 // pred_check_branch
          %848 = sbr.rel (%p846) target = $region44
        $region43: #{tpu_custom_call.1} parent=39 // pred_region
          %s849 = sand.u32 %s118, 1
          %s850 = scalar_lea.sflag [#allocation3], %s849
          %s851 = sand.u32 %s118, 1
          %s852 = smul.addr %s851, 24
          %s853 = scalar_lea.vmem [#allocation2], %s852
          %855 = dma.done %s850, 384
        $region44: #{tpu_custom_call.1} parent=39 // pred_fallthru
          _
      $region40: #{tpu_custom_call.1} parent=5 // pred_fallthru
        _
    $region6: #{tpu_custom_call.1} parent=1 // loop_footer
      %s16 = sadd.s32 1, %s12
    $region7: #{tpu_custom_call.1} parent=1 // loop_footer_branch
      %11 = sbr.rel target = $region3
    $region8: #{tpu_custom_call.1} parent=1 // loop_exit
      _
    %856 = vsyncpa [#allocation3], 1
    %s857 = scalar_lea.sflag [#allocation3], 1
    %858 = vsyncpa %s857, 1

</llo_original>
